<compile_context>
chip_gen: v6e
topology: v6e:2x2x1
jax: 0.10.0
libtpu: 0.0.40
codegen_flags: <defaults>
</compile_context>

<pallas_src>
import functools
import math

import jax
import jax.numpy as jnp
from jax.experimental import pallas as pl
from jax.experimental.pallas import tpu as pltpu


# --------------------------------------------------------------------------- #
# Kernel 1: fused QKV projection over row tiles:  qkv = x @ Wqkv + bqkv  (bf16)
# --------------------------------------------------------------------------- #
def _qkv_proj_kernel(x_ref, w_ref, b_ref, o_ref):
    # x_ref (tm, D) f32, w_ref (D, 3D) bf16 (resident), b_ref (1, 3D) f32
    acc = jnp.dot(x_ref[...].astype(jnp.bfloat16), w_ref[...],
                  preferred_element_type=jnp.float32) + b_ref[...]
    o_ref[...] = acc.astype(o_ref.dtype)


# --------------------------------------------------------------------------- #
# Kernel 2: attention core + output projection + residual + LayerNorm
#   grid = (batch, q_tile, head_group); head_group is the reduction axis.
# --------------------------------------------------------------------------- #
def _attn_core_kernel(G, eps,
                      x_ref, q_ref, k_ref, v_ref, bias_ref,
                      wo_ref, bo_ref, gamma_ref, beta_ref,
                      out_ref, acc_ref):
    # Block shapes:
    #   x_ref    (1, tq, D)     f32   residual rows for this q tile
    #   q_ref    (1, G, tq, dh) bf16  pre-scaled Q for this head group / q tile
    #   k_ref    (1, G, S, dh)  bf16
    #   v_ref    (1, G, S, dh)  bf16
    #   bias_ref (1, tq, S)     bf16  additive mask bias (0 / -1e9)
    #   wo_ref   (H, dh, D)     bf16  FULL output projection (constant block, resident)
    #   bo/gamma/beta (1, D)    f32   constant blocks, resident
    #   acc_ref  (tq, D)        f32   scratch: residual + sum_h ctx_h @ Wo_h
    hg = pl.program_id(2)
    last_group = pl.num_programs(2) - 1
    bf16 = jnp.bfloat16

    @pl.when(hg == 0)
    def _():
        # residual + output-projection bias, initialized once per (batch, q tile)
        acc_ref[...] = x_ref[0] + bo_ref[...]

    bias = bias_ref[0].astype(jnp.float32)                        # (tq, S)

    # statically unrolled loop over the G heads of this group
    for g in range(G):
        q = q_ref[0, g]                                           # (tq, dh) bf16
        k = k_ref[0, g]                                           # (S, dh)  bf16
        v = v_ref[0, g]                                           # (S, dh)  bf16

        # scores = q @ k^T  (contract last dims; no materialized transpose)
        scores = jax.lax.dot_general(
            q, k, dimension_numbers=(((1,), (1,)), ((), ())),
            preferred_element_type=jnp.float32) + bias            # (tq, S) f32

        # numerically stable softmax; reciprocal applied to the small ctx tensor
        m = jnp.max(scores, axis=-1, keepdims=True)
        e = jnp.exp(scores - m)
        denom = jnp.sum(e, axis=-1, keepdims=True)
        ctx = jnp.dot(e.astype(bf16), v,
                      preferred_element_type=jnp.float32)         # (tq, dh) f32
        # approx=True uses the EUP vrcp (~2^-12 rel err); fine for softmax here.
        ctx = ctx * pl.reciprocal(denom, approx=True)

        # accumulate this head's slice of the output projection (no lane concat)
        acc_ref[...] += jnp.dot(ctx.astype(bf16), wo_ref[hg * G + g],
                                preferred_element_type=jnp.float32)

    # last head group: LayerNorm(residual + attention output), write the tile
    @pl.when(hg == last_group)
    def _():
        res = acc_ref[...]
        mean = jnp.mean(res, axis=-1, keepdims=True)
        cent = res - mean
        var = jnp.mean(cent * cent, axis=-1, keepdims=True)
        inv = jax.lax.rsqrt(var + eps)
        out_ref[0] = (cent * inv * gamma_ref[...] + beta_ref[...]).astype(out_ref.dtype)


def _pick_tile(n, preferred):
    """Largest tile <= preferred that divides n and is 8-aligned (or n itself)."""
    if n % preferred == 0:
        return preferred
    for cand in (512, 256, 128, 64, 32, 16, 8):
        if cand <= preferred and n % cand == 0:
            return cand
    return n   # full extent (always legal: block dim equals array dim)


def decoder_attention_forward(x, mask, params, *, num_heads, eps=1e-5,
                              q_tile=256, heads_per_step=None,
                              vmem_limit_bytes=48 * 1024 * 1024):
    """x: [B, S, D] f32, mask: [B, S, S] (1 = keep, 0 = masked)."""
    B, S, D = x.shape
    H = num_heads
    assert D % H == 0, "model dim must be divisible by num_heads"
    dh = D // H
    f32, bf16 = jnp.float32, jnp.bfloat16
    scale = 1.0 / math.sqrt(dh)

    tq = _pick_tile(S, q_tile)
    nq = S // tq
    # NOTE(v7x): with 2 TensorCores the parallel extent B*nq should be >= 2; shrink
    # q_tile if B == 1 and S is small.

    # heads per grid step: fill a ~256-wide contraction for the output projection
    # (v6e/v7x MXU) and cut per-step overhead; must divide H.
    if heads_per_step is None:
        heads_per_step = max(1, min(H, 256 // max(dh, 1)))
    G = max(1, min(H, heads_per_step))
    while H % G != 0:
        G -= 1
    n_hg = H // G

    # ---- fused QKV projection weights (1/sqrt(dh) folded into Wq / bq) ----
    wqkv = jnp.concatenate([params["wq"] * scale, params["wk"], params["wv"]],
                           axis=1).astype(bf16)                               # (D, 3D)
    bqkv = jnp.concatenate([params["bq"] * scale, params["bk"], params["bv"]],
                           axis=1).astype(f32)                                # (1, 3D)

    M = B * S
    tm = _pick_tile(M, 512)
    x2d = x.reshape(M, D)

    qkv = pl.pallas_call(
        _qkv_proj_kernel,
        out_shape=jax.ShapeDtypeStruct((M, 3 * D), bf16),
        grid=(M // tm,),
        in_specs=[
            pl.BlockSpec((tm, D), lambda i: (i, 0)),       # x rows (f32)
            pl.BlockSpec((D, 3 * D), lambda i: (0, 0)),    # Wqkv, resident
            pl.BlockSpec((1, 3 * D), lambda i: (0, 0)),    # bqkv, resident
        ],
        out_specs=pl.BlockSpec((tm, 3 * D), lambda i: (i, 0)),
        compiler_params=pltpu.CompilerParams(
            dimension_semantics=("parallel",),
            vmem_limit_bytes=vmem_limit_bytes),
        cost_estimate=pl.CostEstimate(
            flops=int(2 * M * D * 3 * D),
            transcendentals=0,
            bytes_accessed=int(M * D * 4 + D * 3 * D * 2 + M * 3 * D * 2)),
    )(x2d, wqkv, bqkv)

    # one-time head-major re-layout (cheap XLA relayout, done once per forward)
    def to_head_major(t):                       # (M, D) -> (B, H, S, dh)
        return t.reshape(B, S, H, dh).transpose(0, 2, 1, 3)

    q_h = to_head_major(qkv[:, 0:D])            # (B, H, S, dh) bf16, pre-scaled
    k_h = to_head_major(qkv[:, D:2 * D])
    v_h = to_head_major(qkv[:, 2 * D:3 * D])

    # per-head rows of the output projection; passed as one resident block
    wo_h = params["wo"].reshape(H, dh, D).astype(bf16)                        # (H, dh, D)
    bo = params["bo"].astype(f32)
    gamma = params["gamma"].astype(f32)
    beta = params["beta"].astype(f32)

    # additive attention bias: 0 where mask==1, -1e9 where mask==0 (bf16 halves DMA)
    attn_bias = ((mask.astype(f32) - 1.0) * 1e9).astype(bf16)                 # (B, S, S)

    kernel = functools.partial(_attn_core_kernel, G, eps)
    grid = (B, nq, n_hg)

    flops = int(B * H * (4 * S * S * dh + 2 * S * dh * D))
    bytes_accessed = int(B * S * D * 4          # residual x (f32)
                         + B * S * D * 2        # Q
                         + B * nq * 2 * S * D * 2   # K, V (re-fetched per q tile)
                         + B * S * S * 2        # mask bias
                         + D * D * 2            # Wo (resident)
                         + B * S * D * 4)       # output

    out = pl.pallas_call(
        kernel,
        out_shape=jax.ShapeDtypeStruct((B, S, D), x.dtype),
        grid=grid,
        in_specs=[
            pl.BlockSpec((1, tq, D), lambda b, qi, hg: (b, qi, 0)),         # x residual
            pl.BlockSpec((1, G, tq, dh), lambda b, qi, hg: (b, hg, qi, 0)), # Q group
            pl.BlockSpec((1, G, S, dh), lambda b, qi, hg: (b, hg, 0, 0)),   # K group
            pl.BlockSpec((1, G, S, dh), lambda b, qi, hg: (b, hg, 0, 0)),   # V group
            pl.BlockSpec((1, tq, S), lambda b, qi, hg: (b, qi, 0)),         # mask bias
            pl.BlockSpec((H, dh, D), lambda b, qi, hg: (0, 0, 0)),          # Wo resident
            pl.BlockSpec((1, D), lambda b, qi, hg: (0, 0)),                 # bo
            pl.BlockSpec((1, D), lambda b, qi, hg: (0, 0)),                 # gamma
            pl.BlockSpec((1, D), lambda b, qi, hg: (0, 0)),                 # beta
        ],
        out_specs=pl.BlockSpec((1, tq, D), lambda b, qi, hg: (b, qi, 0)),
        scratch_shapes=[pltpu.VMEM((tq, D), jnp.float32)],
        compiler_params=pltpu.CompilerParams(
            dimension_semantics=("parallel", "parallel", "arbitrary"),
            vmem_limit_bytes=vmem_limit_bytes),
        cost_estimate=pl.CostEstimate(
            flops=flops,
            transcendentals=int(B * H * S * S),
            bytes_accessed=bytes_accessed),
    )(x, q_h, k_h, v_h, attn_bias, wo_h, bo, gamma, beta)
    return out


def _init_params(key, D):
    ks = jax.random.split(key, 4)
    scale = 1.0 / math.sqrt(D)
    return {
        "wq": jax.random.normal(ks[0], (D, D), jnp.float32) * scale,
        "wk": jax.random.normal(ks[1], (D, D), jnp.float32) * scale,
        "wv": jax.random.normal(ks[2], (D, D), jnp.float32) * scale,
        "wo": jax.random.normal(ks[3], (D, D), jnp.float32) * scale,
        "bq": jnp.zeros((1, D), jnp.float32),
        "bk": jnp.zeros((1, D), jnp.float32),
        "bv": jnp.zeros((1, D), jnp.float32),
        "bo": jnp.zeros((1, D), jnp.float32),
        "gamma": jnp.ones((1, D), jnp.float32),
        "beta": jnp.zeros((1, D), jnp.float32),
    }


def _reference(x, mask, params, num_heads, eps=1e-5, matmul_dtype=jnp.float32):
    """Pure-JAX reference. matmul_dtype=bf16 mirrors the kernel's MXU rounding points."""
    B, S, D = x.shape
    dh = D // num_heads
    md = matmul_dtype

    def mm(a, w):
        return jnp.dot(a.astype(md), w.astype(md), preferred_element_type=jnp.float32)

    q = mm(x, params["wq"]) + params["bq"]
    k = mm(x, params["wk"]) + params["bk"]
    v = mm(x, params["wv"]) + params["bv"]

    def split(t):  # [B,S,D] -> [B,H,S,dh]
        return t.reshape(B, S, num_heads, dh).transpose(0, 2, 1, 3)

    qh = split(q) / math.sqrt(dh)
    kh, vh = split(k), split(v)
    scores = jnp.einsum("bhqd,bhkd->bhqk", qh.astype(md), kh.astype(md),
                        preferred_element_type=jnp.float32)
    scores = jnp.where(mask[:, None, :, :] == 0, -1e9, scores)
    attn = jax.nn.softmax(scores, axis=-1)
    out = jnp.einsum("bhqk,bhkd->bhqd", attn.astype(md), vh.astype(md),
                     preferred_element_type=jnp.float32)
    out = out.transpose(0, 2, 1, 3).reshape(B, S, D)
    out = mm(out, params["wo"]) + params["bo"]
    res = x + out                                    # dropout == identity in eval mode
    mean = res.mean(-1, keepdims=True)
    var = ((res - mean) ** 2).mean(-1, keepdims=True)
    return (res - mean) / jnp.sqrt(var + eps) * params["gamma"] + params["beta"]


if __name__ == "__main__":
    B, S, D, H = 2, 8, 32, 4
    key = jax.random.PRNGKey(0)
    kx, kp = jax.random.split(key)

    x = jax.random.normal(kx, (B, S, D), jnp.float32)
    # causal decoder mask: 1 = attend, 0 = masked
    causal = jnp.tril(jnp.ones((S, S), jnp.float32))
    mask = jnp.broadcast_to(causal, (B, S, S))

    params = _init_params(kp, D)

    out = decoder_attention_forward(x, mask, params, num_heads=H)
    out = jax.block_until_ready(out)

    # Tight check against a reference using the same bf16-matmul / f32-accumulate
    # rounding points as the kernel.
    ref_bf16 = _reference(x, mask, params, H, matmul_dtype=jnp.bfloat16)
    assert jnp.allclose(out, ref_bf16, atol=2e-2, rtol=2e-2), "mismatch vs bf16 reference"

    # Loose check against full-f32 module semantics (bf16 MXU inputs shift numerics).
    ref_f32 = _reference(x, mask, params, H, matmul_dtype=jnp.float32)
    assert jnp.allclose(out, ref_f32, atol=1.5e-1, rtol=1.5e-1), "mismatch vs f32 reference"

    # TODO(synk): training-mode dropout omitted (eval-mode identity is implemented).
    print("KERNEL_OK")
</pallas_src>

<mosaic_0001>
module attributes {stable_mosaic.version = 11 : i64} {
  func.func @_qkv_proj_kernel(%arg0: i32, %arg1: memref<16x32xf32, #tpu.memory_space<vmem>>, %arg2: memref<32x96xbf16, #tpu.memory_space<vmem>>, %arg3: memref<1x96xf32, #tpu.memory_space<vmem>>, %arg4: memref<16x96xbf16, #tpu.memory_space<vmem>>) attributes {dimension_semantics = [#tpu.dimension_semantics<parallel>], iteration_bounds = array<i64: 1>, scalar_prefetch = 0 : i64, scratch_operands = 0 : i64, tpu.core_type = #tpu.core_type<tc>, window_params = [{transform_indices = @transform_0, window_bounds = array<i64: 16, 32>}, {pipeline_mode = #tpu.pipeline_mode<synchronous>, transform_indices = @transform_1, window_bounds = array<i64: 32, 96>}, {pipeline_mode = #tpu.pipeline_mode<synchronous>, transform_indices = @transform_2, window_bounds = array<i64: 1, 96>}, {transform_indices = @transform_3, window_bounds = array<i64: 16, 96>}]} {
    %c0 = arith.constant 0 : index
    %c0_0 = arith.constant 0 : index
    %0 = vector.load %arg1[%c0, %c0_0] : memref<16x32xf32, #tpu.memory_space<vmem>>, vector<16x32xf32>
    %1 = arith.truncf %0 : vector<16x32xf32> to vector<16x32xbf16>
    %c0_1 = arith.constant 0 : index
    %c0_2 = arith.constant 0 : index
    %2 = vector.load %arg2[%c0_1, %c0_2] : memref<32x96xbf16, #tpu.memory_space<vmem>>, vector<32x96xbf16>
    %cst = arith.constant dense<0.000000e+00> : vector<16x96xf32>
    %3 = tpu.matmul %1, %2, %cst {dimension_numbers = #tpu.dot_dimension_numbers<[1], [0], [0], [1], [0, 0, 1, 1], [], []>} : vector<16x32xbf16>, vector<32x96xbf16>, vector<16x96xf32> -> vector<16x96xf32>
    %c0_3 = arith.constant 0 : index
    %c0_4 = arith.constant 0 : index
    %4 = vector.load %arg3[%c0_3, %c0_4] : memref<1x96xf32, #tpu.memory_space<vmem>>, vector<1x96xf32>
    %5 = vector.broadcast %4 : vector<1x96xf32> to vector<16x96xf32>
    %6 = arith.addf %3, %5 : vector<16x96xf32>
    %7 = arith.truncf %6 : vector<16x96xf32> to vector<16x96xbf16>
    %c0_5 = arith.constant 0 : index
    %c0_6 = arith.constant 0 : index
    %8 = vector.load %arg4[%c0_5, %c0_6] : memref<16x96xbf16, #tpu.memory_space<vmem>>, vector<16x96xbf16>
    tpu.vector_store %arg4[%c0_5, %c0_6], %7 {strides = array<i32>} : memref<16x96xbf16, #tpu.memory_space<vmem>>, vector<16x96xbf16>,
    return
  }
  func.func @transform_0(%arg0: i32) -> (i32, i32) {
    %c0_i32 = arith.constant 0 : i32
    %c0_i32_0 = arith.constant 0 : i32
    return %arg0, %c0_i32 : i32, i32
  }
  func.func @transform_1(%arg0: i32) -> (i32, i32) {
    %c0_i32 = arith.constant 0 : i32
    %c0_i32_0 = arith.constant 0 : i32
    %c0_i32_1 = arith.constant 0 : i32
    return %c0_i32, %c0_i32_0 : i32, i32
  }
  func.func @transform_2(%arg0: i32) -> (i32, i32) {
    %c0_i32 = arith.constant 0 : i32
    %c0_i32_0 = arith.constant 0 : i32
    %c0_i32_1 = arith.constant 0 : i32
    return %c0_i32, %c0_i32_0 : i32, i32
  }
  func.func @transform_3(%arg0: i32) -> (i32, i32) {
    %c0_i32 = arith.constant 0 : i32
    %c0_i32_0 = arith.constant 0 : i32
    return %arg0, %c0_i32 : i32, i32
  }
}

</mosaic_0001>

<llo_original>
// kernel: tpu_custom_call.1
$region0: #{tpu_custom_call.1}
  #allocation0 [shape = 'u32[]', space=smem, size = 0x4, offset = 0x4, fixed_abs, tag = 'smem constant byte address 0x4 - core index']
  #allocation1 [shape = 'u32[144,128]{1,0:T(1,128)}', space=vmem, size = 0x12000, scoped, tag = 'internal scratch']
  %s0 = inlined_call_operand.hbm [shape: f32[16,32], index: 0, kind: input, shape index: {}]
  %s1 = inlined_call_operand.hbm [shape: bf16[32,96], index: 1, kind: input, shape index: {}]
  %s2 = inlined_call_operand.vmem [shape: f32[1,96], index: 2, kind: input, shape index: {}]
  %s3 = inlined_call_operand.hbm [shape: bf16[16,96], index: 3, kind: output, shape index: {}]
  %s4 = sld [smem:[#allocation0]]
  $region30: #{tpu_custom_call.1} parent=0
    _
  %s6 = ssub.s32 1, %s4
  %s7 = scalar_select 0, %s6, %s4
  $region1: #{tpu_custom_call.1} parent=0
    #allocation2 [shape = 'u8[8192]{0}', space=vmem, size = 0x2000, scoped, tag = 'input window, operand 0, single buffered']
    #allocation3 [shape = 's32[1]{0}', space=sflag, size = 0x4, scoped, tag = 'scoped memory for tpu_custom_call.1']
    #allocation4 [shape = 's32[1]{0}', space=sflag, size = 0x4, scoped, tag = 'scoped memory for tpu_custom_call.1']
    #allocation5 [shape = 'u8[8192]{0}', space=vmem, size = 0x2000, scoped, tag = 'input window, operand 1, single buffered']
    #allocation6 [shape = 's32[1]{0}', space=sflag, size = 0x4, scoped, tag = 'scoped memory for tpu_custom_call.1']
    #allocation7 [shape = 'u8[4096]{0}', space=vmem, size = 0x1000, scoped, tag = 'output window, operand 0, single buffered']
    %8 = vsyncpa [#allocation3], 0
    %9 = vsyncpa [#allocation6], 0
    %10 = vsyncpa [#allocation4], 0
    // Predicated region
    $region2: #{tpu_custom_call.1} parent=1 // pred_check
      _
    $region3: #{tpu_custom_call.1} parent=1 // pred_check_branch
      %12 = sbr.rel (0) target = $region5
    $region4: #{tpu_custom_call.1} parent=1 // pred_region
      %s14 = ssub.s32 256, 256
      %15 = vsyncadd [#allocation3], %s14
      %s16 = sshll.u32 [#allocation2], 4
      %s17 = int_to_ptr.vmem [resolvable:$true] %s16
      %22 = dma.hbm_to_vmem [thread:$0]  %s0, 256, %s17, [#allocation3], 128, 128, 8
    $region5: #{tpu_custom_call.1} parent=1 // pred_fallthru
      _
    // Predicated region
    $region6: #{tpu_custom_call.1} parent=1 // pred_check
      _
    $region7: #{tpu_custom_call.1} parent=1 // pred_check_branch
      %24 = sbr.rel (0) target = $region9
    $region8: #{tpu_custom_call.1} parent=1 // pred_region
      %s26 = ssub.s32 256, 256
      %27 = vsyncadd [#allocation6], %s26
      %s28 = sshll.u32 [#allocation5], 4
      %s29 = int_to_ptr.vmem [resolvable:$true] %s28
      %34 = dma.hbm_to_vmem [thread:$0]  %s1, 256, %s29, [#allocation6], 64, 64, 4
    $region9: #{tpu_custom_call.1} parent=1 // pred_fallthru
      _
    // Predicated region
    $region10: #{tpu_custom_call.1} parent=1 // pred_check
      _
    $region11: #{tpu_custom_call.1} parent=1 // pred_check_branch
      %36 = sbr.rel (0) target = $region13
    $region12: #{tpu_custom_call.1} parent=1 // pred_region
      _
    $region13: #{tpu_custom_call.1} parent=1 // pred_fallthru
      _
    // Predicated region
    $region14: #{tpu_custom_call.1} parent=1 // pred_check
      _
    $region15: #{tpu_custom_call.1} parent=1 // pred_check_branch
      %38 = sbr.rel (0) target = $region17
    $region16: #{tpu_custom_call.1} parent=1 // pred_region
      %39 = dma.done [#allocation3], 256
    $region17: #{tpu_custom_call.1} parent=1 // pred_fallthru
      _
    // Predicated region
    $region18: #{tpu_custom_call.1} parent=1 // pred_check
      _
    $region19: #{tpu_custom_call.1} parent=1 // pred_check_branch
      %41 = sbr.rel (0) target = $region21
    $region20: #{tpu_custom_call.1} parent=1 // pred_region
      %42 = dma.done [#allocation6], 256
    $region21: #{tpu_custom_call.1} parent=1 // pred_fallthru
      _
    %v44 = vld [vmem:[#allocation2] sm:$0xff]
    %v45 = vld [vmem:[#allocation2 + $0x8] sm:$0xff]
    %v46 = vpack.c.bf16 %v45, %v44
    %v47 = vld [vmem:[#allocation5] sm:$0xf]
    %v48 = vld [vmem:[#allocation5 + $0x4] sm:$0xf]
    %v49 = vld [vmem:[#allocation5 + $0x8] sm:$0xf]
    %v50 = vld [vmem:[#allocation5 + $0xc] sm:$0xf]
    %v51 = vld [vmem:[%s2] sm:$0x1]
    %v53 = vlaneseq
    %v54 = vshrl.u32 %v53, 7
    %v55 = vsub.s32 0, %v54
    %v56 = vrot.slane %v51, %v55
    %v62 = vunpack.c.l.b16 %v47
    %v63 = vunpack.c.l.b16 %v48
    %v64 = vunpack.c.l.b16 %v49
    %v65 = vunpack.c.l.b16 %v50
    %v66 = vpack.c.b16 %v63, %v62
    %v67 = vpack.c.b16 %v65, %v64
    %vm70 = vcmask 261120
    %v72 = vsel %vm70, %v46, 0
    %74 = vmatprep.subr.bf16.mxu0 0
    %75 = vmatpush1.bf16.msra.mxu0 0
    %76 = vmatprep.subr.bf16.mxu0 0
    %77 = vmatpush1.bf16.msra.mxu0 0
    %78 = vmatprep.subr.bf16.mxu0 0
    %79 = vmatpush1.bf16.msra.mxu0 0
    %80 = vmatprep.subr.bf16.mxu0 0
    %81 = vmatpush1.bf16.msra.mxu0 0
    %82 = vmatprep.subr.bf16.mxu0 0
    %83 = vmatpush1.bf16.msra.mxu0 0
    %84 = vmatprep.subr.bf16.mxu0 0
    %85 = vmatpush1.bf16.msra.mxu0 0
    %86 = vmatprep.subr.bf16.mxu0 0
    %87 = vmatpush1.bf16.msra.mxu0 %v67
    %88 = vmatprep.subr.bf16.mxu0 0
    %89 = vmatpush1.bf16.msra.mxu0 %v66
    %90 = vmatprep.subr.bf16.mxu0 0
    %91 = vmatpush2.bf16.msra.mxu0 0
    %92 = vmatprep.subr.bf16.mxu0 0
    %93 = vmatpush2.bf16.msra.mxu0 0
    %94 = vmatprep.subr.bf16.mxu0 0
    %95 = vmatpush2.bf16.msra.mxu0 0
    %96 = vmatprep.subr.bf16.mxu0 0
    %97 = vmatpush2.bf16.msra.mxu0 0
    %98 = vmatprep.subr.bf16.mxu0 0
    %99 = vmatpush2.bf16.msra.mxu0 0
    %100 = vmatprep.subr.bf16.mxu0 0
    %101 = vmatpush2.bf16.msra.mxu0 0
    %102 = vmatprep.subr.bf16.mxu0 0
    %103 = vmatpush2.bf16.msra.mxu0 0
    %104 = vmatprep.subr.bf16.mxu0 0
    %105 = vmatpush2.bf16.msra.mxu0 0
    %106 = vmatprep.mubr.bf16.mxu0 0
    %107 = vmatmul.mubr.bf16.gmra.mxu0 %v72
    %v108 = vpop.f32.mrf.mxu0
    %v109 = vadd.f32 %v56, %v108
    %v110 = vpop.f32.mrf.mxu0
    %v111 = vpop.f32.mrf.mxu0
    %v112 = vadd.f32 %v56, %v111
    %v113 = vpop.f32.mrf.mxu0
    %114 = vdwg.mxu0
    %v115 = vpack.c.bf16 %v112, %v109
    %v117 = vunpack.c.l.b16 %v115
    %v118 = vunpack.c.h.b16 %v115
    %v119 = vpack.c.b16 %v117, %v117
    %v120 = vpack.c.b16 %v118, %v118
    %vm123 = vcmask 781312
    %124 = vst.msk [vmem:[#allocation7] sm:$0xf] %vm123, %v119
    %125 = vst.msk [vmem:[#allocation7 + $0x4] sm:$0xf] %vm123, %v120
    // Predicated region
    $region22: #{tpu_custom_call.1} parent=1 // pred_check
      _
    $region23: #{tpu_custom_call.1} parent=1 // pred_check_branch
      %127 = sbr.rel (0) target = $region25
    $region24: #{tpu_custom_call.1} parent=1 // pred_region
      %s129 = ssub.s32 128, 128
      %130 = vsyncadd [#allocation4], %s129
      %s131 = sshll.u32 [#allocation7], 4
      %s132 = int_to_ptr.vmem [resolvable:$true] %s131
      %137 = dma.vmem_to_hbm [thread:$0]  %s132, 128, %s3, [#allocation4], 64, 64, 4
    $region25: #{tpu_custom_call.1} parent=1 // pred_fallthru
      _
    // Predicated region
    $region26: #{tpu_custom_call.1} parent=1 // pred_check
      _
    $region27: #{tpu_custom_call.1} parent=1 // pred_check_branch
      %139 = sbr.rel (0) target = $region29
    $region28: #{tpu_custom_call.1} parent=1 // pred_region
      %140 = dma.done [#allocation4], 128
    $region29: #{tpu_custom_call.1} parent=1 // pred_fallthru
      _
    %141 = vsyncpa [#allocation3], 1
    %142 = vsyncpa [#allocation6], 1
    %143 = vsyncpa [#allocation4], 1

</llo_original>
